<compile_context>
chip_gen: v7x
topology: tpu7x:2x2x1
jax: 0.10.0
libtpu: 0.0.40
codegen_flags: <defaults>
</compile_context>

<pallas_src>
import functools

import jax
import jax.numpy as jnp
from jax.experimental import pallas as pl
from jax.experimental.pallas import tpu as pltpu

LANE = 128          # vreg lane width
SUBLANE_BF16 = 16   # bf16 sublane packing


def _round_up(n, m):
    return ((n + m - 1) // m) * m


def _bf16_eup():
    """True if the EUP has a bf16 datapath (v6e / v7x); False on v5e and older."""
    try:
        kind = jax.devices()[0].device_kind.lower()
    except Exception:
        return False
    return not any(tag in kind for tag in ("v2", "v3", "v4", "v5"))


# ----------------------------------------------------------------------------- kernel
def ffnet_kernel(x_ref, w0_ref, b0_ref, w1_ref, b1_ref, w2_ref, b2_ref, o_ref,
                 *, bf16_act):
    # x arrives f32; cast to bf16 in-kernel (MXU-native operands), accumulate in f32.
    x = x_ref[...].astype(jnp.bfloat16)

    # Block 0: Linear (BN0 folded) -> Tanh
    h = jnp.dot(x, w0_ref[...], preferred_element_type=jnp.float32) + b0_ref[...]
    if bf16_act:
        h = jnp.tanh(h.astype(jnp.bfloat16))        # bf16 EUP path (v6e/v7x)
    else:
        h = jnp.tanh(h).astype(jnp.bfloat16)        # f32 EUP (v5e), then cast for MXU

    # Block 1: Linear (BN1 folded) -> Tanh -> Dropout(eval = identity)
    h = jnp.dot(h, w1_ref[...], preferred_element_type=jnp.float32) + b1_ref[...]
    if bf16_act:
        h = jnp.tanh(h.astype(jnp.bfloat16))
    else:
        h = jnp.tanh(h).astype(jnp.bfloat16)

    # Output Linear (unpadded N -> writeback only the useful columns)
    o_ref[...] = (jnp.dot(h, w2_ref[...], preferred_element_type=jnp.float32)
                  + b2_ref[...]).astype(o_ref.dtype)


# -------------------------------------------------------------------- one-time prep
def prepare_params(p):
    """Fold eval-mode BatchNorm into the Linears, pad hidden dims to 128 lanes, cast
    matmul operands to bf16. Call ONCE per parameter set and reuse across forwards."""
    w0 = p["w0"] * p["s0"]
    b0 = p["b0"] * p["s0"] + p["t0"]
    w1 = p["w1"] * p["s1"]
    b1 = p["b1"] * p["s1"] + p["t1"]
    w2, b2 = p["w2"], p["b2"]

    in_size, h0 = w0.shape
    h1 = w1.shape[1]
    out_size = w2.shape[1]
    h0_p = _round_up(h0, LANE)
    h1_p = _round_up(h1, LANE)

    def pad2(a, r, c):
        return jnp.pad(a, ((0, r - a.shape[0]), (0, c - a.shape[1])))

    # Zero padding of the hidden dims is exact: padded columns get bias 0 -> tanh(0)=0,
    # and the matching padded weight rows of the next layer are 0. K of layer 0 and N of
    # the output layer stay unpadded so x and the output need no host-side pad/slice.
    return dict(
        w0=pad2(w0, in_size, h0_p).astype(jnp.bfloat16),
        b0=pad2(b0, 1, h0_p),                       # biases stay f32
        w1=pad2(w1, h0_p, h1_p).astype(jnp.bfloat16),
        b1=pad2(b1, 1, h1_p),
        w2=pad2(w2, h1_p, out_size).astype(jnp.bfloat16),
        b2=b2,
    )


# --------------------------------------------------------------------------- forward
def ffnet_forward(x, prepped, *, max_tile_m=512):
    """x: (B, in_size) float32. prepped: output of prepare_params (cached)."""
    B, in_size = x.shape
    w0, b0, w1, b1, w2, b2 = (prepped[k] for k in ("w0", "b0", "w1", "b1", "w2", "b2"))
    assert w0.shape[0] == in_size
    h0_p, h1_p, out_size = w0.shape[1], w1.shape[1], w2.shape[1]

    # Batch tile: big tiles amortize the ~0.35us/step overhead, multiple of 16 for bf16
    # sublanes, and >= 2 grid steps whenever the batch allows so v7x's 2nd TC gets work.
    tile_m = min(max_tile_m, max(SUBLANE_BF16, _round_up(pl.cdiv(B, 2), SUBLANE_BF16)))
    grid = (pl.cdiv(B, tile_m),)

    row = lambda i: (i, 0)   # batch-tiled operands
    rep = lambda i: (0, 0)   # weights / biases: constant block (resident in VMEM)

    # NOTE: pipeline_mode=pl.Buffered(1) on the constant-index weight specs would halve
    # their VMEM footprint; left at the default since the weights are tiny here.
    in_specs = [
        pl.BlockSpec((tile_m, in_size), row),    # x (f32, unpadded K)
        pl.BlockSpec((in_size, h0_p), rep),      # w0 (BN0 folded, bf16)
        pl.BlockSpec((1, h0_p), rep),            # b0
        pl.BlockSpec((h0_p, h1_p), rep),         # w1 (BN1 folded, bf16)
        pl.BlockSpec((1, h1_p), rep),            # b1
        pl.BlockSpec((h1_p, out_size), rep),     # w2 (bf16, unpadded N)
        pl.BlockSpec((1, out_size), rep),        # b2
    ]
    out_spec = pl.BlockSpec((tile_m, out_size), row)   # unpadded output, no slice pass

    kernel = functools.partial(ffnet_kernel, bf16_act=_bf16_eup())

    return pl.pallas_call(
        kernel,
        out_shape=jax.ShapeDtypeStruct((B, out_size), jnp.float32),
        grid=grid,
        in_specs=in_specs,
        out_specs=out_spec,
        compiler_params=pltpu.CompilerParams(
            dimension_semantics=("parallel",),
        ),
    )(x, w0, b0, w1, b1, w2, b2)


# ------------------------------------------------------------------------------ init
def init_params(key, in_size, hidden_size, out_size):
    """torch.nn.Linear-style init (uniform +-1/sqrt(fan_in)) + fresh BatchNorm1d stats."""
    dims = [in_size] + list(hidden_size) + [out_size]
    eps = 1e-5
    params = {}
    keys = jax.random.split(key, 2 * (len(dims) - 1))
    for li in range(len(dims) - 1):
        fan_in, fan_out = dims[li], dims[li + 1]
        bound = 1.0 / jnp.sqrt(jnp.float32(fan_in))
        params[f"w{li}"] = jax.random.uniform(keys[2 * li], (fan_in, fan_out),
                                              jnp.float32, -bound, bound)
        params[f"b{li}"] = jax.random.uniform(keys[2 * li + 1], (1, fan_out),
                                              jnp.float32, -bound, bound)
        if li < len(dims) - 2:  # hidden layers carry BatchNorm (eval-mode) params
            gamma = jnp.ones((1, fan_out), jnp.float32)
            beta = jnp.zeros((1, fan_out), jnp.float32)
            run_mean = jnp.zeros((1, fan_out), jnp.float32)
            run_var = jnp.ones((1, fan_out), jnp.float32)
            scale = gamma / jnp.sqrt(run_var + eps)
            params[f"s{li}"] = scale
            params[f"t{li}"] = beta - run_mean * scale
    return params


def ffnet_reference(x, p):
    h = jnp.tanh((x @ p["w0"] + p["b0"]) * p["s0"] + p["t0"])
    h = jnp.tanh((h @ p["w1"] + p["b1"]) * p["s1"] + p["t1"])
    return h @ p["w2"] + p["b2"]


if __name__ == "__main__":
    in_size, hidden_size, out_size = 16, (32, 32), 8
    batch = 16

    key = jax.random.PRNGKey(0)
    kx, kp = jax.random.split(key)
    x = jax.random.normal(kx, (batch, in_size), jnp.float32)
    params = init_params(kp, in_size, hidden_size, out_size)

    # One-time weight preparation (cached); forward reuses it across calls.
    prepped = jax.tree_util.tree_map(jax.block_until_ready, prepare_params(params))
    fwd = jax.jit(ffnet_forward)

    out = jax.block_until_ready(fwd(x, prepped))

    ref = ffnet_reference(x, params)
    assert out.shape == (batch, out_size)
    # bf16 matmul operands + (v6e/v7x) bf16 tanh, f32 accumulation -> loosened tolerance.
    max_err = float(jnp.max(jnp.abs(out - ref)))
    assert jnp.allclose(out, ref, atol=5e-2, rtol=5e-2), \
        f"mismatch vs reference (max abs err {max_err})"

    print("KERNEL_OK")
</pallas_src>

<mosaic_0001>
module attributes {stable_mosaic.version = 11 : i64} {
  func.func @ffnet_kernel(%arg0: i32, %arg1: memref<16x16xf32, #tpu.memory_space<vmem>>, %arg2: memref<16x128xbf16, #tpu.memory_space<vmem>>, %arg3: memref<1x128xf32, #tpu.memory_space<vmem>>, %arg4: memref<128x128xbf16, #tpu.memory_space<vmem>>, %arg5: memref<1x128xf32, #tpu.memory_space<vmem>>, %arg6: memref<128x8xbf16, #tpu.memory_space<vmem>>, %arg7: memref<1x8xf32, #tpu.memory_space<vmem>>, %arg8: memref<16x8xf32, #tpu.memory_space<vmem>>) attributes {dimension_semantics = [#tpu.dimension_semantics<parallel>], iteration_bounds = array<i64: 1>, scalar_prefetch = 0 : i64, scratch_operands = 0 : i64, tpu.core_type = #tpu.core_type<tc>, window_params = [{transform_indices = @transform_0, window_bounds = array<i64: 16, 16>}, {pipeline_mode = #tpu.pipeline_mode<synchronous>, transform_indices = @transform_1, window_bounds = array<i64: 16, 128>}, {pipeline_mode = #tpu.pipeline_mode<synchronous>, transform_indices = @transform_2, window_bounds = array<i64: 1, 128>}, {pipeline_mode = #tpu.pipeline_mode<synchronous>, transform_indices = @transform_3, window_bounds = array<i64: 128, 128>}, {pipeline_mode = #tpu.pipeline_mode<synchronous>, transform_indices = @transform_4, window_bounds = array<i64: 1, 128>}, {pipeline_mode = #tpu.pipeline_mode<synchronous>, transform_indices = @transform_5, window_bounds = array<i64: 128, 8>}, {pipeline_mode = #tpu.pipeline_mode<synchronous>, transform_indices = @transform_6, window_bounds = array<i64: 1, 8>}, {transform_indices = @transform_7, window_bounds = array<i64: 16, 8>}]} {
    %c0 = arith.constant 0 : index
    %c0_0 = arith.constant 0 : index
    %0 = vector.load %arg1[%c0, %c0_0] : memref<16x16xf32, #tpu.memory_space<vmem>>, vector<16x16xf32>
    %1 = arith.truncf %0 : vector<16x16xf32> to vector<16x16xbf16>
    %c0_1 = arith.constant 0 : index
    %c0_2 = arith.constant 0 : index
    %2 = vector.load %arg2[%c0_1, %c0_2] : memref<16x128xbf16, #tpu.memory_space<vmem>>, vector<16x128xbf16>
    %cst = arith.constant dense<0.000000e+00> : vector<16x128xf32>
    %3 = tpu.matmul %1, %2, %cst {dimension_numbers = #tpu.dot_dimension_numbers<[1], [0], [0], [1], [0, 0, 1, 1], [], []>} : vector<16x16xbf16>, vector<16x128xbf16>, vector<16x128xf32> -> vector<16x128xf32>
    %c0_3 = arith.constant 0 : index
    %c0_4 = arith.constant 0 : index
    %4 = vector.load %arg3[%c0_3, %c0_4] : memref<1x128xf32, #tpu.memory_space<vmem>>, vector<1x128xf32>
    %5 = vector.broadcast %4 : vector<1x128xf32> to vector<16x128xf32>
    %6 = arith.addf %3, %5 : vector<16x128xf32>
    %7 = arith.truncf %6 : vector<16x128xf32> to vector<16x128xbf16>
    %8 = math.tanh %7 : vector<16x128xbf16>
    %c0_5 = arith.constant 0 : index
    %c0_6 = arith.constant 0 : index
    %9 = vector.load %arg4[%c0_5, %c0_6] : memref<128x128xbf16, #tpu.memory_space<vmem>>, vector<128x128xbf16>
    %cst_7 = arith.constant dense<0.000000e+00> : vector<16x128xf32>
    %10 = tpu.matmul %8, %9, %cst_7 {dimension_numbers = #tpu.dot_dimension_numbers<[1], [0], [0], [1], [0, 0, 1, 1], [], []>} : vector<16x128xbf16>, vector<128x128xbf16>, vector<16x128xf32> -> vector<16x128xf32>
    %c0_8 = arith.constant 0 : index
    %c0_9 = arith.constant 0 : index
    %11 = vector.load %arg5[%c0_8, %c0_9] : memref<1x128xf32, #tpu.memory_space<vmem>>, vector<1x128xf32>
    %12 = vector.broadcast %11 : vector<1x128xf32> to vector<16x128xf32>
    %13 = arith.addf %10, %12 : vector<16x128xf32>
    %14 = arith.truncf %13 : vector<16x128xf32> to vector<16x128xbf16>
    %15 = math.tanh %14 : vector<16x128xbf16>
    %c0_10 = arith.constant 0 : index
    %c0_11 = arith.constant 0 : index
    %16 = vector.load %arg6[%c0_10, %c0_11] : memref<128x8xbf16, #tpu.memory_space<vmem>>, vector<128x8xbf16>
    %cst_12 = arith.constant dense<0.000000e+00> : vector<16x8xf32>
    %17 = tpu.matmul %15, %16, %cst_12 {dimension_numbers = #tpu.dot_dimension_numbers<[1], [0], [0], [1], [0, 0, 1, 1], [], []>} : vector<16x128xbf16>, vector<128x8xbf16>, vector<16x8xf32> -> vector<16x8xf32>
    %c0_13 = arith.constant 0 : index
    %c0_14 = arith.constant 0 : index
    %18 = vector.load %arg7[%c0_13, %c0_14] : memref<1x8xf32, #tpu.memory_space<vmem>>, vector<1x8xf32>
    %19 = vector.broadcast %18 : vector<1x8xf32> to vector<16x8xf32>
    %20 = arith.addf %17, %19 : vector<16x8xf32>
    %c0_15 = arith.constant 0 : index
    %c0_16 = arith.constant 0 : index
    %21 = vector.load %arg8[%c0_15, %c0_16] : memref<16x8xf32, #tpu.memory_space<vmem>>, vector<16x8xf32>
    tpu.vector_store %arg8[%c0_15, %c0_16], %20 {strides = array<i32>} : memref<16x8xf32, #tpu.memory_space<vmem>>, vector<16x8xf32>,
    return
  }
  func.func @transform_0(%arg0: i32) -> (i32, i32) {
    %c0_i32 = arith.constant 0 : i32
    %c0_i32_0 = arith.constant 0 : i32
    return %arg0, %c0_i32 : i32, i32
  }
  func.func @transform_1(%arg0: i32) -> (i32, i32) {
    %c0_i32 = arith.constant 0 : i32
    %c0_i32_0 = arith.constant 0 : i32
    %c0_i32_1 = arith.constant 0 : i32
    return %c0_i32, %c0_i32_0 : i32, i32
  }
  func.func @transform_2(%arg0: i32) -> (i32, i32) {
    %c0_i32 = arith.constant 0 : i32
    %c0_i32_0 = arith.constant 0 : i32
    %c0_i32_1 = arith.constant 0 : i32
    return %c0_i32, %c0_i32_0 : i32, i32
  }
  func.func @transform_3(%arg0: i32) -> (i32, i32) {
    %c0_i32 = arith.constant 0 : i32
    %c0_i32_0 = arith.constant 0 : i32
    %c0_i32_1 = arith.constant 0 : i32
    return %c0_i32, %c0_i32_0 : i32, i32
  }
  func.func @transform_4(%arg0: i32) -> (i32, i32) {
    %c0_i32 = arith.constant 0 : i32
    %c0_i32_0 = arith.constant 0 : i32
    %c0_i32_1 = arith.constant 0 : i32
    return %c0_i32, %c0_i32_0 : i32, i32
  }
  func.func @transform_5(%arg0: i32) -> (i32, i32) {
    %c0_i32 = arith.constant 0 : i32
    %c0_i32_0 = arith.constant 0 : i32
    %c0_i32_1 = arith.constant 0 : i32
    return %c0_i32, %c0_i32_0 : i32, i32
  }
  func.func @transform_6(%arg0: i32) -> (i32, i32) {
    %c0_i32 = arith.constant 0 : i32
    %c0_i32_0 = arith.constant 0 : i32
    %c0_i32_1 = arith.constant 0 : i32
    return %c0_i32, %c0_i32_0 : i32, i32
  }
  func.func @transform_7(%arg0: i32) -> (i32, i32) {
    %c0_i32 = arith.constant 0 : i32
    %c0_i32_0 = arith.constant 0 : i32
    return %arg0, %c0_i32 : i32, i32
  }
}

</mosaic_0001>

<llo_original>
// kernel: ffnet_forward.1
$region0: #{ffnet_forward.1}
  #allocation0 [shape = 'u32[]', space=smem, size = 0x4, offset = 0x4, fixed_abs, tag = 'smem constant byte address 0x4 - core index']
  #allocation1 [shape = 'u32[144,128]{1,0:T(1,128)}', space=vmem, size = 0x12000, scoped, tag = 'internal scratch']
  %s0 = inlined_call_operand.vmem [shape: f32[16,16], index: 0, kind: input, shape index: {}]
  %s1 = inlined_call_operand.hbm [shape: bf16[16,128], index: 1, kind: input, shape index: {}]
  %s2 = inlined_call_operand.vmem [shape: f32[1,128], index: 2, kind: input, shape index: {}]
  %s3 = inlined_call_operand.vmem [shape: bf16[128,128], index: 3, kind: input, shape index: {}]
  %s4 = inlined_call_operand.vmem [shape: f32[1,128], index: 4, kind: input, shape index: {}]
  %s5 = inlined_call_operand.vmem [shape: bf16[128,8], index: 5, kind: input, shape index: {}]
  %s6 = inlined_call_operand.vmem [shape: f32[1,8], index: 6, kind: input, shape index: {}]
  %s7 = inlined_call_operand.vmem [shape: f32[16,8], index: 7, kind: output, shape index: {}]
  %s8 = sld [smem:[#allocation0]]
  $region42: #{ffnet_forward.1} parent=0
    _
  %s10 = ssub.s32 1, %s8
  %s11 = scalar_select 0, %s10, %s8
  $region1: #{ffnet_forward.1} parent=0
    #allocation2 [shape = 'u8[4096]{0}', space=vmem, size = 0x1000, scoped, tag = 'input window, operand 1, single buffered']
    #allocation3 [shape = 's32[1]{0}', space=sflag, size = 0x4, scoped, tag = 'scoped memory for ffnet_forward.1']
    %12 = vsyncpa [#allocation3], 0
    // Predicated region
    $region2: #{ffnet_forward.1} parent=1 // pred_check
      _
    $region3: #{ffnet_forward.1} parent=1 // pred_check_branch
      %14 = sbr.rel (0) target = $region5
    $region4: #{ffnet_forward.1} parent=1 // pred_region
      _
    $region5: #{ffnet_forward.1} parent=1 // pred_fallthru
      _
    // Predicated region
    $region6: #{ffnet_forward.1} parent=1 // pred_check
      _
    $region7: #{ffnet_forward.1} parent=1 // pred_check_branch
      %16 = sbr.rel (0) target = $region9
    $region8: #{ffnet_forward.1} parent=1 // pred_region
      %s18 = ssub.s32 128, 128
      %19 = vsyncadd [#allocation3], %s18
      %s20 = sshll.u32 [#allocation2], 4
      %s21 = int_to_ptr.vmem [resolvable:$true] %s20
      %26 = dma.hbm_to_vmem [thread:$0]  %s1, 128, %s21, [#allocation3], 64, 64, 4
    $region9: #{ffnet_forward.1} parent=1 // pred_fallthru
      _
    // Predicated region
    $region10: #{ffnet_forward.1} parent=1 // pred_check
      _
    $region11: #{ffnet_forward.1} parent=1 // pred_check_branch
      %28 = sbr.rel (0) target = $region13
    $region12: #{ffnet_forward.1} parent=1 // pred_region
      _
    $region13: #{ffnet_forward.1} parent=1 // pred_fallthru
      _
    // Predicated region
    $region14: #{ffnet_forward.1} parent=1 // pred_check
      _
    $region15: #{ffnet_forward.1} parent=1 // pred_check_branch
      %30 = sbr.rel (0) target = $region17
    $region16: #{ffnet_forward.1} parent=1 // pred_region
      _
    $region17: #{ffnet_forward.1} parent=1 // pred_fallthru
      _
    // Predicated region
    $region18: #{ffnet_forward.1} parent=1 // pred_check
      _
    $region19: #{ffnet_forward.1} parent=1 // pred_check_branch
      %32 = sbr.rel (0) target = $region21
    $region20: #{ffnet_forward.1} parent=1 // pred_region
      _
    $region21: #{ffnet_forward.1} parent=1 // pred_fallthru
      _
    // Predicated region
    $region22: #{ffnet_forward.1} parent=1 // pred_check
      _
    $region23: #{ffnet_forward.1} parent=1 // pred_check_branch
      %34 = sbr.rel (0) target = $region25
    $region24: #{ffnet_forward.1} parent=1 // pred_region
      _
    $region25: #{ffnet_forward.1} parent=1 // pred_fallthru
      _
    // Predicated region
    $region26: #{ffnet_forward.1} parent=1 // pred_check
      _
    $region27: #{ffnet_forward.1} parent=1 // pred_check_branch
      %36 = sbr.rel (0) target = $region29
    $region28: #{ffnet_forward.1} parent=1 // pred_region
      _
    $region29: #{ffnet_forward.1} parent=1 // pred_fallthru
      _
    // Predicated region
    $region30: #{ffnet_forward.1} parent=1 // pred_check
      _
    $region31: #{ffnet_forward.1} parent=1 // pred_check_branch
      %38 = sbr.rel (0) target = $region33
    $region32: #{ffnet_forward.1} parent=1 // pred_region
      %39 = dma.done [#allocation3], 128
    $region33: #{ffnet_forward.1} parent=1 // pred_fallthru
      _
    %v41 = vld [vmem:[%s0] sm:$0xff]
    %v42 = vld [vmem:[%s0 + $0x8] sm:$0xff]
    %v43 = vpack.c.bf16 %v42, %v41
    %v44 = vld [vmem:[#allocation2] sm:$0xf]
    %v45 = vld [vmem:[#allocation2 + $0x4] sm:$0xf]
    %v46 = vld [vmem:[%s2] sm:$0x1]
    %v48 = vlaneseq
    %v49 = vshrl.u32 %v48, 7
    %v50 = vsub.s32 0, %v49
    %v51 = vrot.slane %v46, %v50
    %v55 = vunpack.c.l.b16 %v44
    %v56 = vunpack.c.l.b16 %v45
    %v57 = vpack.c.b16 %v56, %v55
    %vm59 = vcmask 130048
    %v61 = vsel %vm59, %v43, 0
    %63 = vmatprep.subr.bf16.mxu0 0
    %64 = vmatpush1.bf16.msra.mxu0 %v57
    %65 = vmatprep.subr.bf16.mxu0 0
    %66 = vmatpush1.bf16.msra.mxu0 0
    %67 = vmatprep.subr.bf16.mxu0 0
    %68 = vmatpush1.bf16.msra.mxu0 0
    %69 = vmatprep.subr.bf16.mxu0 0
    %70 = vmatpush1.bf16.msra.mxu0 0
    %71 = vmatprep.subr.bf16.mxu0 0
    %72 = vmatpush1.bf16.msra.mxu0 0
    %73 = vmatprep.subr.bf16.mxu0 0
    %74 = vmatpush1.bf16.msra.mxu0 0
    %75 = vmatprep.subr.bf16.mxu0 0
    %76 = vmatpush1.bf16.msra.mxu0 0
    %77 = vmatprep.subr.bf16.mxu0 0
    %78 = vmatpush1.bf16.msra.mxu0 0
    %79 = vmatprep.subr.bf16.mxu0 0
    %80 = vmatpush1.bf16.msra.mxu0 0
    %81 = vmatprep.subr.bf16.mxu0 0
    %82 = vmatpush1.bf16.msra.mxu0 0
    %83 = vmatprep.subr.bf16.mxu0 0
    %84 = vmatpush1.bf16.msra.mxu0 0
    %85 = vmatprep.subr.bf16.mxu0 0
    %86 = vmatpush1.bf16.msra.mxu0 0
    %87 = vmatprep.subr.bf16.mxu0 0
    %88 = vmatpush1.bf16.msra.mxu0 0
    %89 = vmatprep.subr.bf16.mxu0 0
    %90 = vmatpush1.bf16.msra.mxu0 0
    %91 = vmatprep.subr.bf16.mxu0 0
    %92 = vmatpush1.bf16.msra.mxu0 0
    %93 = vmatprep.subr.bf16.mxu0 0
    %94 = vmatpush1.bf16.msra.mxu0 0
    %95 = vmatprep.mubr.bf16.mxu0 0
    %96 = vmatmul.mubr.bf16.gmra.mrb[0].mxu0 %v61
    %v97 = vpop.f32.mrb[0].mxu0
    %v98 = vadd.f32 %v51, %v97
    %v99 = vpop.f32.mrb[0].mxu0
    %v100 = vpop.f32.mrb[0].mxu0
    %v101 = vadd.f32 %v51, %v100
    %v102 = vpop.f32.mrb[0].mxu0
    %103 = vdwg.mxu0
    %v104 = vpack.c.bf16 %v101, %v98
    %v105 = vtanh.bf16.pop %v104
    %v106 = vld [vmem:[%s3] sm:$0xf]
    %v107 = vld [vmem:[%s3 + $0x4] sm:$0xf]
    %v108 = vld [vmem:[%s3 + $0x8] sm:$0xf]
    %v109 = vld [vmem:[%s3 + $0xc] sm:$0xf]
    %v110 = vld [vmem:[%s3 + $0x10] sm:$0xf]
    %v111 = vld [vmem:[%s3 + $0x14] sm:$0xf]
    %v112 = vld [vmem:[%s3 + $0x18] sm:$0xf]
    %v113 = vld [vmem:[%s3 + $0x1c] sm:$0xf]
    %v114 = vld [vmem:[%s3 + $0x20] sm:$0xf]
    %v115 = vld [vmem:[%s3 + $0x24] sm:$0xf]
    %v116 = vld [vmem:[%s3 + $0x28] sm:$0xf]
    %v117 = vld [vmem:[%s3 + $0x2c] sm:$0xf]
    %v118 = vld [vmem:[%s3 + $0x30] sm:$0xf]
    %v119 = vld [vmem:[%s3 + $0x34] sm:$0xf]
    %v120 = vld [vmem:[%s3 + $0x38] sm:$0xf]
    %v121 = vld [vmem:[%s3 + $0x3c] sm:$0xf]
    %v122 = vld [vmem:[%s4] sm:$0x1]
    %v124 = vlaneseq
    %v125 = vshrl.u32 %v124, 7
    %v126 = vsub.s32 0, %v125
    %v127 = vrot.slane %v122, %v126
    %v145 = vunpack.c.l.b16 %v106
    %v146 = vunpack.c.l.b16 %v107
    %v147 = vunpack.c.l.b16 %v108
    %v148 = vunpack.c.l.b16 %v109
    %v149 = vunpack.c.l.b16 %v110
    %v150 = vunpack.c.l.b16 %v111
    %v151 = vunpack.c.l.b16 %v112
    %v152 = vunpack.c.l.b16 %v113
    %v153 = vunpack.c.l.b16 %v114
    %v154 = vunpack.c.l.b16 %v115
    %v155 = vunpack.c.l.b16 %v116
    %v156 = vunpack.c.l.b16 %v117
    %v157 = vunpack.c.l.b16 %v118
    %v158 = vunpack.c.l.b16 %v119
    %v159 = vunpack.c.l.b16 %v120
    %v160 = vunpack.c.l.b16 %v121
    %v161 = vpack.c.b16 %v146, %v145
    %v162 = vpack.c.b16 %v148, %v147
    %v163 = vpack.c.b16 %v150, %v149
    %v164 = vpack.c.b16 %v152, %v151
    %v165 = vpack.c.b16 %v154, %v153
    %v166 = vpack.c.b16 %v156, %v155
    %v167 = vpack.c.b16 %v158, %v157
    %v168 = vpack.c.b16 %v160, %v159
    %177 = vmatprep.subr.bf16.mxu0 0
    %178 = vmatpush1.bf16.msra.mxu0 %v161
    %179 = vmatprep.subr.bf16.mxu0 0
    %180 = vmatpush1.bf16.msra.mxu0 %v162
    %181 = vmatprep.subr.bf16.mxu0 0
    %182 = vmatpush1.bf16.msra.mxu0 %v163
    %183 = vmatprep.subr.bf16.mxu0 0
    %184 = vmatpush1.bf16.msra.mxu0 %v164
    %185 = vmatprep.subr.bf16.mxu0 0
    %186 = vmatpush1.bf16.msra.mxu0 %v165
    %187 = vmatprep.subr.bf16.mxu0 0
    %188 = vmatpush1.bf16.msra.mxu0 %v166
    %189 = vmatprep.subr.bf16.mxu0 0
    %190 = vmatpush1.bf16.msra.mxu0 %v167
    %191 = vmatprep.subr.bf16.mxu0 0
    %192 = vmatpush1.bf16.msra.mxu0 %v168
    %193 = vmatprep.subr.bf16.mxu0 0
    %194 = vmatpush1.bf16.msra.mxu0 0
    %195 = vmatprep.subr.bf16.mxu0 0
    %196 = vmatpush1.bf16.msra.mxu0 0
    %197 = vmatprep.subr.bf16.mxu0 0
    %198 = vmatpush1.bf16.msra.mxu0 0
    %199 = vmatprep.subr.bf16.mxu0 0
    %200 = vmatpush1.bf16.msra.mxu0 0
    %201 = vmatprep.subr.bf16.mxu0 0
    %202 = vmatpush1.bf16.msra.mxu0 0
    %203 = vmatprep.subr.bf16.mxu0 0
    %204 = vmatpush1.bf16.msra.mxu0 0
    %205 = vmatprep.subr.bf16.mxu0 0
    %206 = vmatpush1.bf16.msra.mxu0 0
    %207 = vmatprep.subr.bf16.mxu0 0
    %208 = vmatpush1.bf16.msra.mxu0 0
    %209 = vmatprep.mubr.bf16.mxu0 0
    %210 = vmatmul.mubr.bf16.gmra.mrb[0].mxu0 %v105
    %v211 = vpop.f32.mrb[0].mxu0
    %v212 = vadd.f32 %v127, %v211
    %v213 = vpop.f32.mrb[0].mxu0
    %v214 = vpop.f32.mrb[0].mxu0
    %v215 = vadd.f32 %v127, %v214
    %v216 = vpop.f32.mrb[0].mxu0
    %217 = vdwg.mxu0
    %v218 = vpack.c.bf16 %v215, %v212
    %v219 = vtanh.bf16.pop %v218
    %v220 = vld [vmem:[%s5] sm:$0xf]
    %v221 = vld [vmem:[%s5 + $0x4] sm:$0xf]
    %v222 = vld [vmem:[%s5 + $0x8] sm:$0xf]
    %v223 = vld [vmem:[%s5 + $0xc] sm:$0xf]
    %v224 = vld [vmem:[%s5 + $0x10] sm:$0xf]
    %v225 = vld [vmem:[%s5 + $0x14] sm:$0xf]
    %v226 = vld [vmem:[%s5 + $0x18] sm:$0xf]
    %v227 = vld [vmem:[%s5 + $0x1c] sm:$0xf]
    %v228 = vld [vmem:[%s5 + $0x20] sm:$0xf]
    %v229 = vld [vmem:[%s5 + $0x24] sm:$0xf]
    %v230 = vld [vmem:[%s5 + $0x28] sm:$0xf]
    %v231 = vld [vmem:[%s5 + $0x2c] sm:$0xf]
    %v232 = vld [vmem:[%s5 + $0x30] sm:$0xf]
    %v233 = vld [vmem:[%s5 + $0x34] sm:$0xf]
    %v234 = vld [vmem:[%s5 + $0x38] sm:$0xf]
    %v235 = vld [vmem:[%s5 + $0x3c] sm:$0xf]
    %v236 = vld [vmem:[%s6] sm:$0x1]
    %v238 = vlaneseq
    %v239 = vshrl.u32 %v238, 7
    %v240 = vsub.s32 0, %v239
    %v241 = vrot.slane %v236, %v240
    %v259 = vunpack.c.l.b16 %v220
    %v260 = vunpack.c.l.b16 %v221
    %v261 = vunpack.c.l.b16 %v222
    %v262 = vunpack.c.l.b16 %v223
    %v263 = vunpack.c.l.b16 %v224
    %v264 = vunpack.c.l.b16 %v225
    %v265 = vunpack.c.l.b16 %v226
    %v266 = vunpack.c.l.b16 %v227
    %v267 = vunpack.c.l.b16 %v228
    %v268 = vunpack.c.l.b16 %v229
    %v269 = vunpack.c.l.b16 %v230
    %v270 = vunpack.c.l.b16 %v231
    %v271 = vunpack.c.l.b16 %v232
    %v272 = vunpack.c.l.b16 %v233
    %v273 = vunpack.c.l.b16 %v234
    %v274 = vunpack.c.l.b16 %v235
    %v275 = vpack.c.b16 %v260, %v259
    %v276 = vpack.c.b16 %v262, %v261
    %v277 = vpack.c.b16 %v264, %v263
    %v278 = vpack.c.b16 %v266, %v265
    %v279 = vpack.c.b16 %v268, %v267
    %v280 = vpack.c.b16 %v270, %v269
    %v281 = vpack.c.b16 %v272, %v271
    %v282 = vpack.c.b16 %v274, %v273
    %291 = vmatprep.subr.bf16.mxu0 0
    %292 = vmatpush1.bf16.msra.mxu0 %v275
    %293 = vmatprep.subr.bf16.mxu0 0
    %294 = vmatpush1.bf16.msra.mxu0 %v276
    %295 = vmatprep.subr.bf16.mxu0 0
    %296 = vmatpush1.bf16.msra.mxu0 %v277
    %297 = vmatprep.subr.bf16.mxu0 0
    %298 = vmatpush1.bf16.msra.mxu0 %v278
    %299 = vmatprep.subr.bf16.mxu0 0
    %300 = vmatpush1.bf16.msra.mxu0 %v279
    %301 = vmatprep.subr.bf16.mxu0 0
    %302 = vmatpush1.bf16.msra.mxu0 %v280
    %303 = vmatprep.subr.bf16.mxu0 0
    %304 = vmatpush1.bf16.msra.mxu0 %v281
    %305 = vmatprep.subr.bf16.mxu0 0
    %306 = vmatpush1.bf16.msra.mxu0 %v282
    %307 = vmatprep.subr.bf16.mxu0 0
    %308 = vmatpush1.bf16.msra.mxu0 0
    %309 = vmatprep.subr.bf16.mxu0 0
    %310 = vmatpush1.bf16.msra.mxu0 0
    %311 = vmatprep.subr.bf16.mxu0 0
    %312 = vmatpush1.bf16.msra.mxu0 0
    %313 = vmatprep.subr.bf16.mxu0 0
    %314 = vmatpush1.bf16.msra.mxu0 0
    %315 = vmatprep.subr.bf16.mxu0 0
    %316 = vmatpush1.bf16.msra.mxu0 0
    %317 = vmatprep.subr.bf16.mxu0 0
    %318 = vmatpush1.bf16.msra.mxu0 0
    %319 = vmatprep.subr.bf16.mxu0 0
    %320 = vmatpush1.bf16.msra.mxu0 0
    %321 = vmatprep.subr.bf16.mxu0 0
    %322 = vmatpush1.bf16.msra.mxu0 0
    %323 = vmatprep.mubr.bf16.mxu0 0
    %324 = vmatmul.mubr.bf16.gmra.mrb[0].mxu0 %v219
    %v325 = vpop.f32.mrb[0].mxu0
    %v326 = vadd.f32 %v241, %v325
    %v327 = vpop.f32.mrb[0].mxu0
    %v328 = vpop.f32.mrb[0].mxu0
    %v329 = vadd.f32 %v241, %v328
    %v330 = vpop.f32.mrb[0].mxu0
    %331 = vdwg.mxu0
    %vm332 = vcmask 64512
    %333 = vst.msk [vmem:[%s7] sm:$0xff] %vm332, %v326
    %334 = vst.msk [vmem:[%s7 + $0x8] sm:$0xff] %vm332, %v329
    // Predicated region
    $region34: #{ffnet_forward.1} parent=1 // pred_check
      _
    $region35: #{ffnet_forward.1} parent=1 // pred_check_branch
      %336 = sbr.rel (0) target = $region37
    $region36: #{ffnet_forward.1} parent=1 // pred_region
      _
    $region37: #{ffnet_forward.1} parent=1 // pred_fallthru
      _
    // Predicated region
    $region38: #{ffnet_forward.1} parent=1 // pred_check
      _
    $region39: #{ffnet_forward.1} parent=1 // pred_check_branch
      %338 = sbr.rel (0) target = $region41
    $region40: #{ffnet_forward.1} parent=1 // pred_region
      _
    $region41: #{ffnet_forward.1} parent=1 // pred_fallthru
      _
    %339 = vsyncpa [#allocation3], 1

</llo_original>
